<compile_context>
chip_gen: v6e
topology: v6e:2x2x1
jax: 0.10.0
libtpu: 0.0.40
codegen_flags: <defaults>
</compile_context>

<pallas_src>
import jax
import jax.numpy as jnp
from jax.experimental import pallas as pl
from jax.experimental.pallas import tpu as pltpu

LANE = 128      # lane width; packed hidden width is a multiple of this (or of the slot)
DROP_P = 0.1    # nn.Dropout(0.1)


def _round_up(n, m):
    return (n + m - 1) // m * m


# ---------------------------------------------------------------------------
# Kernel: fused 4-dot MLP on the packed (block-diagonal) layout.
# ---------------------------------------------------------------------------
def _sampling_kernel(x_ref, keep_ref,
                     w1_ref, b1_ref, w2_ref, b2_ref,
                     w3_ref, b3_ref, w4_ref, b4_ref,
                     out_ref):
    h = jnp.dot(x_ref[...], w1_ref[...], preferred_element_type=jnp.float32) + b1_ref[...]
    h = jnp.maximum(h, 0.0)                                            # ReLU
    h = jnp.dot(h, w2_ref[...], preferred_element_type=jnp.float32) + b2_ref[...]
    h = h * keep_ref[...]                                              # dropout keep mask {0,1}
    # 1/(1-p) scale is folded into W3 at pack time.
    h = jnp.tanh(jnp.dot(h, w3_ref[...], preferred_element_type=jnp.float32) + b3_ref[...])
    h = jnp.tanh(jnp.dot(h, w4_ref[...], preferred_element_type=jnp.float32) + b4_ref[...])
    out_ref[...] = jnp.tanh(h)                                         # extra tanh in _forward


def _build_call(rows_pad, tile, x_width, hw):
    grid = (rows_pad // tile,)
    row = lambda i: (i, 0)    # batch-tiled arrays
    full = lambda i: (0, 0)   # weights/biases: same block every step -> VMEM resident

    in_specs = [
        pl.BlockSpec((tile, x_width), row),    # packed [state|noise] input
        pl.BlockSpec((tile, hw), row),         # packed dropout keep mask
        pl.BlockSpec((x_width, hw), full),     # W1 (block-diagonal)
        pl.BlockSpec((1, hw), full),           # b1
        pl.BlockSpec((hw, hw), full),          # W2
        pl.BlockSpec((1, hw), full),           # b2
        pl.BlockSpec((hw, hw), full),          # W3 (scale-folded)
        pl.BlockSpec((1, hw), full),           # b3
        pl.BlockSpec((hw, hw), full),          # W4
        pl.BlockSpec((1, hw), full),           # b4
    ]
    return pl.pallas_call(
        _sampling_kernel,
        out_shape=jax.ShapeDtypeStruct((rows_pad, hw), jnp.float32),
        grid=grid,
        in_specs=in_specs,
        out_specs=pl.BlockSpec((tile, hw), row),
        compiler_params=pltpu.CompilerParams(
            dimension_semantics=("parallel",),      # shard batch tiles across TCs on v7x
            vmem_limit_bytes=48 * 1024 * 1024,      # safe on v7x (64 MiB) and v5e/v6e (128 MiB)
        ),
    )


# ---------------------------------------------------------------------------
# Parameter packing: block-diagonal lane packing + dropout scale folding.
# ---------------------------------------------------------------------------
def pack_params(params, state_dim, action_dim, hidden):
    """Pack `pack` batch rows per operand row using block-diagonal weights."""
    (w1, b1), (w2, b2), (w3, b3), (w4, b4) = params
    h1, h2 = hidden
    in_dim = state_dim + action_dim
    slot = max(8, pl.next_power_of_2(max(h1, h2, action_dim)))
    pack = max(1, LANE // slot)          # e.g. hidden=32 -> 4 rows per lane-packed row
    hw = pack * slot                     # packed hidden width (>= 128 or full dim)

    def bdiag(w, row_stride):
        r, c = w.shape
        out = jnp.zeros((pack * row_stride, hw), jnp.float32)
        for k in range(pack):
            out = out.at[k * row_stride:k * row_stride + r,
                         k * slot:k * slot + c].set(w)
        return out

    def btile(b):
        out = jnp.zeros((1, hw), jnp.float32)
        for k in range(pack):
            out = out.at[:, k * slot:k * slot + b.shape[1]].set(b)
        return out

    w3_scaled = w3 * jnp.float32(1.0 / (1.0 - DROP_P))   # fold inverted-dropout scale

    return {
        "pack": pack, "slot": slot, "hw": hw,
        "in_dim": in_dim, "h2": h2, "action_dim": action_dim,
        "w1": bdiag(w1, in_dim), "b1": btile(b1),
        "w2": bdiag(w2, slot),   "b2": btile(b2),
        "w3": bdiag(w3_scaled, slot), "b3": btile(b3),
        "w4": bdiag(w4, slot),   "b4": btile(b4),
    }


def _draw_randomness(rng, batch_shape, action_dim, h2):
    """noise ~ U[-2,2), keep ~ Bernoulli(0.9) as float {0,1} (training-mode dropout)."""
    k_noise, k_drop = jax.random.split(rng)
    noise = jax.random.uniform(k_noise, batch_shape + (action_dim,), jnp.float32, -2.0, 2.0)
    keep = jax.random.bernoulli(k_drop, 1.0 - DROP_P, batch_shape + (h2,)).astype(jnp.float32)
    return noise, keep


# ---------------------------------------------------------------------------
# Wrapper: particle folding, lane packing, tiling, slice-back.
# ---------------------------------------------------------------------------
def sampling_network_forward(state, packed, rng, *, n_particles=1, tile_rows=1024):
    """state: (n_state_samples, state_dim) -> (n, p, action_dim) or (n, action_dim)."""
    ns, state_dim = state.shape
    pack, slot, hw = packed["pack"], packed["slot"], packed["hw"]
    in_dim, h2, action_dim = packed["in_dim"], packed["h2"], packed["action_dim"]

    if n_particles > 1:
        batch_shape = (ns, n_particles)
        state_b = jnp.broadcast_to(state[:, None, :], (ns, n_particles, state_dim))
    else:
        batch_shape = (ns,)
        state_b = state

    noise, keep = _draw_randomness(rng, batch_shape, action_dim, h2)
    x = jnp.concatenate([state_b, noise], axis=-1).reshape(-1, in_dim)
    keep = keep.reshape(-1, h2)

    # Lane packing: `pack` consecutive batch rows per operand row (free row-major reshape).
    b = x.shape[0]
    bp = _round_up(b, pack)
    x = jnp.pad(x, ((0, bp - b), (0, 0)))
    keep = jnp.pad(keep, ((0, bp - b), (0, slot - h2)))
    rows = bp // pack
    xp = x.reshape(rows, pack * in_dim)
    kp = keep.reshape(rows, hw)

    # Tile selection: big tiles (grid overhead ~0.35us/step), multiple of 8, and >=2 grid
    # steps when possible so v7x's two TensorCores both get work.
    tile = max(8, min(tile_rows, _round_up(rows, 8)))
    if rows >= 16:
        tile = min(tile, _round_up((rows + 1) // 2, 8))
    rows_pad = _round_up(rows, tile)
    xp = jnp.pad(xp, ((0, rows_pad - rows), (0, 0)))
    kp = jnp.pad(kp, ((0, rows_pad - rows), (0, 0)))

    out = _build_call(rows_pad, tile, pack * in_dim, hw)(
        xp, kp,
        packed["w1"], packed["b1"], packed["w2"], packed["b2"],
        packed["w3"], packed["b3"], packed["w4"], packed["b4"])

    out = out[:rows].reshape(bp, slot)[:b, :action_dim]
    out = out.reshape(batch_shape + (action_dim,))
    if ns == 1:                     # module squeezes the state-sample dim when n == 1
        out = out[0]
    return out


def init_linear(key, fan_in, fan_out):
    """PyTorch-style Linear init: U[-1/sqrt(fan_in), 1/sqrt(fan_in)]; stored as (in, out)."""
    kw, kb = jax.random.split(key)
    bound = 1.0 / jnp.sqrt(jnp.float32(fan_in))
    w = jax.random.uniform(kw, (fan_in, fan_out), jnp.float32, -bound, bound)
    b = jax.random.uniform(kb, (1, fan_out), jnp.float32, -bound, bound)
    return w, b


if __name__ == "__main__":
    # Small shapes consistent with the module.
    state_dim, action_dim = 12, 4
    hidden = (32, 32)
    n_state_samples = 24
    n_particles = 4

    key = jax.random.PRNGKey(0)
    k_state, k1, k2, k3, k4, k_rng, k_rng1 = jax.random.split(key, 7)

    params = (
        init_linear(k1, state_dim + action_dim, hidden[0]),
        init_linear(k2, hidden[0], hidden[1]),
        init_linear(k3, hidden[1], hidden[1]),
        init_linear(k4, hidden[1], action_dim),
    )
    packed = pack_params(params, state_dim, action_dim, hidden)
    state = jax.random.normal(k_state, (n_state_samples, state_dim), jnp.float32)

    # Fused kernel, particles folded into the batch (single pallas_call).
    out = sampling_network_forward(state, packed, k_rng, n_particles=n_particles)
    jax.block_until_ready(out)
    assert out.shape == (n_state_samples, n_particles, action_dim)

    # Pure-JAX reference using the exact same noise / dropout draws.
    (w1, b1), (w2, b2), (w3, b3), (w4, b4) = params
    noise, keep = _draw_randomness(k_rng, (n_state_samples, n_particles), action_dim, hidden[1])
    state_b = jnp.broadcast_to(state[:, None, :], (n_state_samples, n_particles, state_dim))
    x = jnp.concatenate([state_b, noise], axis=-1)
    h = jnp.maximum(x @ w1 + b1, 0.0)
    h = (h @ w2 + b2) * keep * (1.0 / (1.0 - DROP_P))
    h = jnp.tanh(h @ w3 + b3)
    h = jnp.tanh(h @ w4 + b4)
    ref = jnp.tanh(h)

    assert jnp.allclose(out, ref, atol=1e-4, rtol=1e-4), float(jnp.max(jnp.abs(out - ref)))
    assert jnp.all(jnp.abs(out) <= 1.0)

    # n_particles == 1 path.
    out1 = sampling_network_forward(state, packed, k_rng1, n_particles=1)
    jax.block_until_ready(out1)
    assert out1.shape == (n_state_samples, action_dim)
    assert jnp.all(jnp.isfinite(out1))

    print("KERNEL_OK")
</pallas_src>

<mosaic_0001>
module attributes {stable_mosaic.version = 11 : i64} {
  func.func @_sampling_kernel(%arg0: i32, %arg1: memref<16x64xf32, #tpu.memory_space<vmem>>, %arg2: memref<16x128xf32, #tpu.memory_space<vmem>>, %arg3: memref<64x128xf32, #tpu.memory_space<vmem>>, %arg4: memref<1x128xf32, #tpu.memory_space<vmem>>, %arg5: memref<128x128xf32, #tpu.memory_space<vmem>>, %arg6: memref<1x128xf32, #tpu.memory_space<vmem>>, %arg7: memref<128x128xf32, #tpu.memory_space<vmem>>, %arg8: memref<1x128xf32, #tpu.memory_space<vmem>>, %arg9: memref<128x128xf32, #tpu.memory_space<vmem>>, %arg10: memref<1x128xf32, #tpu.memory_space<vmem>>, %arg11: memref<16x128xf32, #tpu.memory_space<vmem>>) attributes {dimension_semantics = [#tpu.dimension_semantics<parallel>], iteration_bounds = array<i64: 2>, scalar_prefetch = 0 : i64, scratch_operands = 0 : i64, tpu.core_type = #tpu.core_type<tc>, window_params = [{transform_indices = @transform_0, window_bounds = array<i64: 16, 64>}, {transform_indices = @transform_1, window_bounds = array<i64: 16, 128>}, {pipeline_mode = #tpu.pipeline_mode<synchronous>, transform_indices = @transform_2, window_bounds = array<i64: 64, 128>}, {pipeline_mode = #tpu.pipeline_mode<synchronous>, transform_indices = @transform_3, window_bounds = array<i64: 1, 128>}, {pipeline_mode = #tpu.pipeline_mode<synchronous>, transform_indices = @transform_4, window_bounds = array<i64: 128, 128>}, {pipeline_mode = #tpu.pipeline_mode<synchronous>, transform_indices = @transform_5, window_bounds = array<i64: 1, 128>}, {pipeline_mode = #tpu.pipeline_mode<synchronous>, transform_indices = @transform_6, window_bounds = array<i64: 128, 128>}, {pipeline_mode = #tpu.pipeline_mode<synchronous>, transform_indices = @transform_7, window_bounds = array<i64: 1, 128>}, {pipeline_mode = #tpu.pipeline_mode<synchronous>, transform_indices = @transform_8, window_bounds = array<i64: 128, 128>}, {pipeline_mode = #tpu.pipeline_mode<synchronous>, transform_indices = @transform_9, window_bounds = array<i64: 1, 128>}, {transform_indices = @transform_10, window_bounds = array<i64: 16, 128>}]} {
    %c0 = arith.constant 0 : index
    %c0_0 = arith.constant 0 : index
    %0 = vector.load %arg1[%c0, %c0_0] : memref<16x64xf32, #tpu.memory_space<vmem>>, vector<16x64xf32>
    %c0_1 = arith.constant 0 : index
    %c0_2 = arith.constant 0 : index
    %1 = vector.load %arg3[%c0_1, %c0_2] : memref<64x128xf32, #tpu.memory_space<vmem>>, vector<64x128xf32>
    %cst = arith.constant dense<0.000000e+00> : vector<16x128xf32>
    %2 = tpu.matmul %0, %1, %cst {dimension_numbers = #tpu.dot_dimension_numbers<[1], [0], [0], [1], [0, 0, 1, 1], [], []>} : vector<16x64xf32>, vector<64x128xf32>, vector<16x128xf32> -> vector<16x128xf32>
    %c0_3 = arith.constant 0 : index
    %c0_4 = arith.constant 0 : index
    %3 = vector.load %arg4[%c0_3, %c0_4] : memref<1x128xf32, #tpu.memory_space<vmem>>, vector<1x128xf32>
    %4 = vector.broadcast %3 : vector<1x128xf32> to vector<16x128xf32>
    %5 = arith.addf %2, %4 : vector<16x128xf32>
    %cst_5 = arith.constant 0.000000e+00 : f32
    %6 = vector.broadcast %cst_5 : f32 to vector<16x128xf32>
    %7 = arith.maximumf %5, %6 : vector<16x128xf32>
    %c0_6 = arith.constant 0 : index
    %c0_7 = arith.constant 0 : index
    %8 = vector.load %arg5[%c0_6, %c0_7] : memref<128x128xf32, #tpu.memory_space<vmem>>, vector<128x128xf32>
    %cst_8 = arith.constant dense<0.000000e+00> : vector<16x128xf32>
    %9 = tpu.matmul %7, %8, %cst_8 {dimension_numbers = #tpu.dot_dimension_numbers<[1], [0], [0], [1], [0, 0, 1, 1], [], []>} : vector<16x128xf32>, vector<128x128xf32>, vector<16x128xf32> -> vector<16x128xf32>
    %c0_9 = arith.constant 0 : index
    %c0_10 = arith.constant 0 : index
    %10 = vector.load %arg6[%c0_9, %c0_10] : memref<1x128xf32, #tpu.memory_space<vmem>>, vector<1x128xf32>
    %11 = vector.broadcast %10 : vector<1x128xf32> to vector<16x128xf32>
    %12 = arith.addf %9, %11 : vector<16x128xf32>
    %c0_11 = arith.constant 0 : index
    %c0_12 = arith.constant 0 : index
    %13 = vector.load %arg2[%c0_11, %c0_12] : memref<16x128xf32, #tpu.memory_space<vmem>>, vector<16x128xf32>
    %14 = arith.mulf %12, %13 : vector<16x128xf32>
    %c0_13 = arith.constant 0 : index
    %c0_14 = arith.constant 0 : index
    %15 = vector.load %arg7[%c0_13, %c0_14] : memref<128x128xf32, #tpu.memory_space<vmem>>, vector<128x128xf32>
    %cst_15 = arith.constant dense<0.000000e+00> : vector<16x128xf32>
    %16 = tpu.matmul %14, %15, %cst_15 {dimension_numbers = #tpu.dot_dimension_numbers<[1], [0], [0], [1], [0, 0, 1, 1], [], []>} : vector<16x128xf32>, vector<128x128xf32>, vector<16x128xf32> -> vector<16x128xf32>
    %c0_16 = arith.constant 0 : index
    %c0_17 = arith.constant 0 : index
    %17 = vector.load %arg8[%c0_16, %c0_17] : memref<1x128xf32, #tpu.memory_space<vmem>>, vector<1x128xf32>
    %18 = vector.broadcast %17 : vector<1x128xf32> to vector<16x128xf32>
    %19 = arith.addf %16, %18 : vector<16x128xf32>
    %20 = math.tanh %19 : vector<16x128xf32>
    %c0_18 = arith.constant 0 : index
    %c0_19 = arith.constant 0 : index
    %21 = vector.load %arg9[%c0_18, %c0_19] : memref<128x128xf32, #tpu.memory_space<vmem>>, vector<128x128xf32>
    %cst_20 = arith.constant dense<0.000000e+00> : vector<16x128xf32>
    %22 = tpu.matmul %20, %21, %cst_20 {dimension_numbers = #tpu.dot_dimension_numbers<[1], [0], [0], [1], [0, 0, 1, 1], [], []>} : vector<16x128xf32>, vector<128x128xf32>, vector<16x128xf32> -> vector<16x128xf32>
    %c0_21 = arith.constant 0 : index
    %c0_22 = arith.constant 0 : index
    %23 = vector.load %arg10[%c0_21, %c0_22] : memref<1x128xf32, #tpu.memory_space<vmem>>, vector<1x128xf32>
    %24 = vector.broadcast %23 : vector<1x128xf32> to vector<16x128xf32>
    %25 = arith.addf %22, %24 : vector<16x128xf32>
    %26 = math.tanh %25 : vector<16x128xf32>
    %27 = math.tanh %26 : vector<16x128xf32>
    %c0_23 = arith.constant 0 : index
    %c0_24 = arith.constant 0 : index
    %28 = vector.load %arg11[%c0_23, %c0_24] : memref<16x128xf32, #tpu.memory_space<vmem>>, vector<16x128xf32>
    tpu.vector_store %arg11[%c0_23, %c0_24], %27 {strides = array<i32>} : memref<16x128xf32, #tpu.memory_space<vmem>>, vector<16x128xf32>,
    return
  }
  func.func @transform_0(%arg0: i32) -> (i32, i32) {
    %c0_i32 = arith.constant 0 : i32
    %c0_i32_0 = arith.constant 0 : i32
    return %arg0, %c0_i32 : i32, i32
  }
  func.func @transform_1(%arg0: i32) -> (i32, i32) {
    %c0_i32 = arith.constant 0 : i32
    %c0_i32_0 = arith.constant 0 : i32
    return %arg0, %c0_i32 : i32, i32
  }
  func.func @transform_2(%arg0: i32) -> (i32, i32) {
    %c0_i32 = arith.constant 0 : i32
    %c0_i32_0 = arith.constant 0 : i32
    %c0_i32_1 = arith.constant 0 : i32
    return %c0_i32, %c0_i32_0 : i32, i32
  }
  func.func @transform_3(%arg0: i32) -> (i32, i32) {
    %c0_i32 = arith.constant 0 : i32
    %c0_i32_0 = arith.constant 0 : i32
    %c0_i32_1 = arith.constant 0 : i32
    return %c0_i32, %c0_i32_0 : i32, i32
  }
  func.func @transform_4(%arg0: i32) -> (i32, i32) {
    %c0_i32 = arith.constant 0 : i32
    %c0_i32_0 = arith.constant 0 : i32
    %c0_i32_1 = arith.constant 0 : i32
    return %c0_i32, %c0_i32_0 : i32, i32
  }
  func.func @transform_5(%arg0: i32) -> (i32, i32) {
    %c0_i32 = arith.constant 0 : i32
    %c0_i32_0 = arith.constant 0 : i32
    %c0_i32_1 = arith.constant 0 : i32
    return %c0_i32, %c0_i32_0 : i32, i32
  }
  func.func @transform_6(%arg0: i32) -> (i32, i32) {
    %c0_i32 = arith.constant 0 : i32
    %c0_i32_0 = arith.constant 0 : i32
    %c0_i32_1 = arith.constant 0 : i32
    return %c0_i32, %c0_i32_0 : i32, i32
  }
  func.func @transform_7(%arg0: i32) -> (i32, i32) {
    %c0_i32 = arith.constant 0 : i32
    %c0_i32_0 = arith.constant 0 : i32
    %c0_i32_1 = arith.constant 0 : i32
    return %c0_i32, %c0_i32_0 : i32, i32
  }
  func.func @transform_8(%arg0: i32) -> (i32, i32) {
    %c0_i32 = arith.constant 0 : i32
    %c0_i32_0 = arith.constant 0 : i32
    %c0_i32_1 = arith.constant 0 : i32
    return %c0_i32, %c0_i32_0 : i32, i32
  }
  func.func @transform_9(%arg0: i32) -> (i32, i32) {
    %c0_i32 = arith.constant 0 : i32
    %c0_i32_0 = arith.constant 0 : i32
    %c0_i32_1 = arith.constant 0 : i32
    return %c0_i32, %c0_i32_0 : i32, i32
  }
  func.func @transform_10(%arg0: i32) -> (i32, i32) {
    %c0_i32 = arith.constant 0 : i32
    %c0_i32_0 = arith.constant 0 : i32
    return %arg0, %c0_i32 : i32, i32
  }
}

</mosaic_0001>

<llo_original>
// kernel: tpu_custom_call.1
$region0: #{tpu_custom_call.1}
  #allocation0 [shape = 'u32[]', space=smem, size = 0x4, offset = 0x4, fixed_abs, tag = 'smem constant byte address 0x4 - core index']
  #allocation1 [shape = 'u32[144,128]{1,0:T(1,128)}', space=vmem, size = 0x12000, scoped, tag = 'internal scratch']
  %s0 = inlined_call_operand.hbm [shape: f32[32,64], index: 0, kind: input, shape index: {}]
  %s1 = inlined_call_operand.hbm [shape: f32[32,128], index: 1, kind: input, shape index: {}]
  %s2 = inlined_call_operand.hbm [shape: f32[64,128], index: 2, kind: input, shape index: {}]
  %s3 = inlined_call_operand.vmem [shape: f32[1,128], index: 3, kind: input, shape index: {}]
  %s4 = inlined_call_operand.hbm [shape: f32[128,128], index: 4, kind: input, shape index: {}]
  %s5 = inlined_call_operand.vmem [shape: f32[1,128], index: 5, kind: input, shape index: {}]
  %s6 = inlined_call_operand.hbm [shape: f32[128,128], index: 6, kind: input, shape index: {}]
  %s7 = inlined_call_operand.vmem [shape: f32[1,128], index: 7, kind: input, shape index: {}]
  %s8 = inlined_call_operand.hbm [shape: f32[128,128], index: 8, kind: input, shape index: {}]
  %s9 = inlined_call_operand.vmem [shape: f32[1,128], index: 9, kind: input, shape index: {}]
  %s10 = inlined_call_operand.hbm [shape: f32[32,128], index: 10, kind: output, shape index: {}]
  %s11 = sld [smem:[#allocation0]]
  $region97: #{tpu_custom_call.1} parent=0
    _
  %s13 = ssub.s32 1, %s11
  %s14 = scalar_select 0, %s13, %s11
  $region1: #{tpu_custom_call.1} parent=0
    #allocation2 [shape = 'u8[16384]{0}', space=vmem, size = 0x4000, scoped, tag = 'input window, operand 0']
    #allocation3 [shape = 's32[2]{0}', space=sflag, size = 0x8, scoped, tag = 'scoped memory for tpu_custom_call.1']
    #allocation4 [shape = 's32[2]{0}', space=sflag, size = 0x8, scoped, tag = 'scoped memory for tpu_custom_call.1']
    #allocation5 [shape = 'u8[16384]{0}', space=vmem, size = 0x4000, scoped, tag = 'input window, operand 1']
    #allocation6 [shape = 's32[2]{0}', space=sflag, size = 0x8, scoped, tag = 'scoped memory for tpu_custom_call.1']
    #allocation7 [shape = 'u8[32768]{0}', space=vmem, size = 0x8000, scoped, tag = 'input window, operand 2, single buffered']
    #allocation8 [shape = 'u8[65536]{0}', space=vmem, size = 0x10000, scoped, tag = 'input window, operand 4, single buffered']
    #allocation9 [shape = 's32[1]{0}', space=sflag, size = 0x4, scoped, tag = 'scoped memory for tpu_custom_call.1']
    #allocation10 [shape = 'u8[65536]{0}', space=vmem, size = 0x10000, scoped, tag = 'input window, operand 6, single buffered']
    #allocation11 [shape = 'u8[65536]{0}', space=vmem, size = 0x10000, scoped, tag = 'input window, operand 8, single buffered']
    #allocation12 [shape = 's32[1]{0}', space=sflag, size = 0x4, scoped, tag = 'scoped memory for tpu_custom_call.1']
    #allocation13 [shape = 'u8[16384]{0}', space=vmem, size = 0x4000, scoped, tag = 'output window, operand 0']
    %15 = vsyncpa [#allocation3], 0
    %s16 = scalar_lea.sflag [#allocation3], 1
    %17 = vsyncpa %s16, 0
    %18 = vsyncpa [#allocation6], 0
    %s19 = scalar_lea.sflag [#allocation6], 1
    %20 = vsyncpa %s19, 0
    %21 = vsyncpa [#allocation9], 0
    %22 = vsyncpa [#allocation12], 0
    %23 = vsyncpa [#allocation4], 0
    %s24 = scalar_lea.sflag [#allocation4], 1
    %25 = vsyncpa %s24, 0
    loop: start=0, step=1, limit=4
    $region2: #{tpu_custom_call.1} parent=1 // loop_pre_header
      _
    $region3: #{tpu_custom_call.1} parent=1 // loop_header
      %s27 = sphi 0, %s31
      %p28 = scmp.ge.s32.totalorder %s27, 4
      %s37 = sphi 0, %s39
      %s40 = sphi 0, %s37
      %s41 = sphi 0, %s40
      %s57 = sphi 0, %s41
      %s63 = sphi 0, %s65
      %s66 = sphi 0, %s63
      %s67 = sphi 0, %s66
      %s83 = sphi 0, %s67
      %s87 = sphi 0, %s87
      %s89 = sphi 0, %s87
      %s90 = sphi 0, %s89
      %s104 = sphi 0, %s90
      %s108 = sphi 0, %s108
      %s110 = sphi 0, %s108
      %s111 = sphi 0, %s110
      %s125 = sphi 0, %s111
      %s129 = sphi 0, %s129
      %s131 = sphi 0, %s129
      %s132 = sphi 0, %s131
      %s146 = sphi 0, %s132
      %s150 = sphi 0, %s150
      %s152 = sphi 0, %s150
      %s153 = sphi 0, %s152
      %s167 = sphi 0, %s153
      %s171 = sphi 0, %s171
      %s173 = sphi 0, %s171
      %s174 = sphi 0, %s173
      %s188 = sphi 0, %s174
      %s192 = sphi 0, %s192
      %s194 = sphi 0, %s192
      %s195 = sphi 0, %s194
      %s209 = sphi 0, %s195
      %s213 = sphi 0, %s213
      %s215 = sphi 0, %s213
      %s216 = sphi 0, %s215
      %s230 = sphi 0, %s216
      %s234 = sphi 0, %s234
      %s236 = sphi 0, %s234
      %s237 = sphi 0, %s236
      %s251 = sphi 0, %s237
      %s257 = sphi 0, %s259
      %s260 = sphi 0, %s257
      %s261 = sphi 0, %s260
      %s277 = sphi 0, %s261
    $region4: #{tpu_custom_call.1} parent=1 // loop_header_branch
      %30 = sbr.rel (%p28) target = $region8
    $region5: #{tpu_custom_call.1} parent=1 // loop_body
      %s32 = ssub.s32 %s27, 1
      %s33 = ssub.s32 %s27, 2
      %s34 = sadd.s32 %s27, 1
      %s35 = ssub.s32 %s27, %s34
      %p36 = scmp.eq.s32.totalorder %s35, 0
      %s38 = sadd.s32 %s37, 1
      %s39 = scalar_select %p36, %s37, %s38
      %p42 = pneg %p36
      %p43 = scmp.eq.s32.totalorder %s27, 1
      %p44 = por %p42, %p43
      %p45 = scmp.ne.s32.totalorder %s37, %s40
      %p46 = scmp.eq.s32.totalorder %s27, 0
      %p47 = por %p45, %p46
      %p48 = scmp.ne.s32.totalorder %s37, %s40
      %p49 = scmp.eq.s32.totalorder %s32, 1
      %p50 = por %p48, %p49
      %p51 = scmp.ne.s32.totalorder %s40, %s41
      %p52 = scmp.eq.s32.totalorder %s32, 0
      %p53 = por %p51, %p52
      %p54 = scmp.ne.s32.totalorder %s40, %s41
      %p55 = scmp.eq.s32.totalorder %s33, 1
      %p56 = por %p54, %p55
      %p58 = scmp.ne.s32.totalorder %s41, %s57
      %p59 = scmp.eq.s32.totalorder %s33, 0
      %p60 = por %p58, %p59
      %s61 = ssub.s32 %s27, %s34
      %p62 = scmp.eq.s32.totalorder %s61, 0
      %s64 = sadd.s32 %s63, 1
      %s65 = scalar_select %p62, %s63, %s64
      %p68 = pneg %p62
      %p69 = scmp.eq.s32.totalorder %s27, 1
      %p70 = por %p68, %p69
      %p71 = scmp.ne.s32.totalorder %s63, %s66
      %p72 = scmp.eq.s32.totalorder %s27, 0
      %p73 = por %p71, %p72
      %p74 = scmp.ne.s32.totalorder %s63, %s66
      %p75 = scmp.eq.s32.totalorder %s32, 1
      %p76 = por %p74, %p75
      %p77 = scmp.ne.s32.totalorder %s66, %s67
      %p78 = scmp.eq.s32.totalorder %s32, 0
      %p79 = por %p77, %p78
      %p80 = scmp.ne.s32.totalorder %s66, %s67
      %p81 = scmp.eq.s32.totalorder %s33, 1
      %p82 = por %p80, %p81
      %p84 = scmp.ne.s32.totalorder %s67, %s83
      %p85 = scmp.eq.s32.totalorder %s33, 0
      %p86 = por %p84, %p85
      %s88 = sadd.s32 %s87, 1
      %p91 = scmp.eq.s32.totalorder %s27, 1
      %p92 = scmp.ne.s32.totalorder %s87, %s89
      %p93 = scmp.eq.s32.totalorder %s27, 0
      %p94 = por %p92, %p93
      %p95 = scmp.ne.s32.totalorder %s87, %s89
      %p96 = scmp.eq.s32.totalorder %s32, 1
      %p97 = por %p95, %p96
      %p98 = scmp.ne.s32.totalorder %s89, %s90
      %p99 = scmp.eq.s32.totalorder %s32, 0
      %p100 = por %p98, %p99
      %p101 = scmp.ne.s32.totalorder %s89, %s90
      %p102 = scmp.eq.s32.totalorder %s33, 1
      %p103 = por %p101, %p102
      %p105 = scmp.ne.s32.totalorder %s90, %s104
      %p106 = scmp.eq.s32.totalorder %s33, 0
      %p107 = por %p105, %p106
      %s109 = sadd.s32 %s108, 1
      %p112 = scmp.eq.s32.totalorder %s27, 1
      %p113 = scmp.ne.s32.totalorder %s108, %s110
      %p114 = scmp.eq.s32.totalorder %s27, 0
      %p115 = por %p113, %p114
      %p116 = scmp.ne.s32.totalorder %s108, %s110
      %p117 = scmp.eq.s32.totalorder %s32, 1
      %p118 = por %p116, %p117
      %p119 = scmp.ne.s32.totalorder %s110, %s111
      %p120 = scmp.eq.s32.totalorder %s32, 0
      %p121 = por %p119, %p120
      %p122 = scmp.ne.s32.totalorder %s110, %s111
      %p123 = scmp.eq.s32.totalorder %s33, 1
      %p124 = por %p122, %p123
      %p126 = scmp.ne.s32.totalorder %s111, %s125
      %p127 = scmp.eq.s32.totalorder %s33, 0
      %p128 = por %p126, %p127
      %s130 = sadd.s32 %s129, 1
      %p133 = scmp.eq.s32.totalorder %s27, 1
      %p134 = scmp.ne.s32.totalorder %s129, %s131
      %p135 = scmp.eq.s32.totalorder %s27, 0
      %p136 = por %p134, %p135
      %p137 = scmp.ne.s32.totalorder %s129, %s131
      %p138 = scmp.eq.s32.totalorder %s32, 1
      %p139 = por %p137, %p138
      %p140 = scmp.ne.s32.totalorder %s131, %s132
      %p141 = scmp.eq.s32.totalorder %s32, 0
      %p142 = por %p140, %p141
      %p143 = scmp.ne.s32.totalorder %s131, %s132
      %p144 = scmp.eq.s32.totalorder %s33, 1
      %p145 = por %p143, %p144
      %p147 = scmp.ne.s32.totalorder %s132, %s146
      %p148 = scmp.eq.s32.totalorder %s33, 0
      %p149 = por %p147, %p148
      %s151 = sadd.s32 %s150, 1
      %p154 = scmp.eq.s32.totalorder %s27, 1
      %p155 = scmp.ne.s32.totalorder %s150, %s152
      %p156 = scmp.eq.s32.totalorder %s27, 0
      %p157 = por %p155, %p156
      %p158 = scmp.ne.s32.totalorder %s150, %s152
      %p159 = scmp.eq.s32.totalorder %s32, 1
      %p160 = por %p158, %p159
      %p161 = scmp.ne.s32.totalorder %s152, %s153
      %p162 = scmp.eq.s32.totalorder %s32, 0
      %p163 = por %p161, %p162
      %p164 = scmp.ne.s32.totalorder %s152, %s153
      %p165 = scmp.eq.s32.totalorder %s33, 1
      %p166 = por %p164, %p165
      %p168 = scmp.ne.s32.totalorder %s153, %s167
      %p169 = scmp.eq.s32.totalorder %s33, 0
      %p170 = por %p168, %p169
      %s172 = sadd.s32 %s171, 1
      %p175 = scmp.eq.s32.totalorder %s27, 1
      %p176 = scmp.ne.s32.totalorder %s171, %s173
      %p177 = scmp.eq.s32.totalorder %s27, 0
      %p178 = por %p176, %p177
      %p179 = scmp.ne.s32.totalorder %s171, %s173
      %p180 = scmp.eq.s32.totalorder %s32, 1
      %p181 = por %p179, %p180
      %p182 = scmp.ne.s32.totalorder %s173, %s174
      %p183 = scmp.eq.s32.totalorder %s32, 0
      %p184 = por %p182, %p183
      %p185 = scmp.ne.s32.totalorder %s173, %s174
      %p186 = scmp.eq.s32.totalorder %s33, 1
      %p187 = por %p185, %p186
      %p189 = scmp.ne.s32.totalorder %s174, %s188
      %p190 = scmp.eq.s32.totalorder %s33, 0
      %p191 = por %p189, %p190
      %s193 = sadd.s32 %s192, 1
      %p196 = scmp.eq.s32.totalorder %s27, 1
      %p197 = scmp.ne.s32.totalorder %s192, %s194
      %p198 = scmp.eq.s32.totalorder %s27, 0
      %p199 = por %p197, %p198
      %p200 = scmp.ne.s32.totalorder %s192, %s194
      %p201 = scmp.eq.s32.totalorder %s32, 1
      %p202 = por %p200, %p201
      %p203 = scmp.ne.s32.totalorder %s194, %s195
      %p204 = scmp.eq.s32.totalorder %s32, 0
      %p205 = por %p203, %p204
      %p206 = scmp.ne.s32.totalorder %s194, %s195
      %p207 = scmp.eq.s32.totalorder %s33, 1
      %p208 = por %p206, %p207
      %p210 = scmp.ne.s32.totalorder %s195, %s209
      %p211 = scmp.eq.s32.totalorder %s33, 0
      %p212 = por %p210, %p211
      %s214 = sadd.s32 %s213, 1
      %p217 = scmp.eq.s32.totalorder %s27, 1
      %p218 = scmp.ne.s32.totalorder %s213, %s215
      %p219 = scmp.eq.s32.totalorder %s27, 0
      %p220 = por %p218, %p219
      %p221 = scmp.ne.s32.totalorder %s213, %s215
      %p222 = scmp.eq.s32.totalorder %s32, 1
      %p223 = por %p221, %p222
      %p224 = scmp.ne.s32.totalorder %s215, %s216
      %p225 = scmp.eq.s32.totalorder %s32, 0
      %p226 = por %p224, %p225
      %p227 = scmp.ne.s32.totalorder %s215, %s216
      %p228 = scmp.eq.s32.totalorder %s33, 1
      %p229 = por %p227, %p228
      %p231 = scmp.ne.s32.totalorder %s216, %s230
      %p232 = scmp.eq.s32.totalorder %s33, 0
      %p233 = por %p231, %p232
      %s235 = sadd.s32 %s234, 1
      %p238 = scmp.eq.s32.totalorder %s27, 1
      %p239 = scmp.ne.s32.totalorder %s234, %s236
      %p240 = scmp.eq.s32.totalorder %s27, 0
      %p241 = por %p239, %p240
      %p242 = scmp.ne.s32.totalorder %s234, %s236
      %p243 = scmp.eq.s32.totalorder %s32, 1
      %p244 = por %p242, %p243
      %p245 = scmp.ne.s32.totalorder %s236, %s237
      %p246 = scmp.eq.s32.totalorder %s32, 0
      %p247 = por %p245, %p246
      %p248 = scmp.ne.s32.totalorder %s236, %s237
      %p249 = scmp.eq.s32.totalorder %s33, 1
      %p250 = por %p248, %p249
      %p252 = scmp.ne.s32.totalorder %s237, %s251
      %p253 = scmp.eq.s32.totalorder %s33, 0
      %p254 = por %p252, %p253
      %s255 = ssub.s32 %s27, %s34
      %p256 = scmp.eq.s32.totalorder %s255, 0
      %s258 = sadd.s32 %s257, 1
      %s259 = scalar_select %p256, %s257, %s258
      %p262 = pneg %p256
      %p263 = scmp.eq.s32.totalorder %s27, 1
      %p264 = por %p262, %p263
      %p265 = scmp.ne.s32.totalorder %s257, %s260
      %p266 = scmp.eq.s32.totalorder %s27, 0
      %p267 = por %p265, %p266
      %p268 = scmp.ne.s32.totalorder %s257, %s260
      %p269 = scmp.eq.s32.totalorder %s32, 1
      %p270 = por %p268, %p269
      %p271 = scmp.ne.s32.totalorder %s260, %s261
      %p272 = scmp.eq.s32.totalorder %s32, 0
      %p273 = por %p271, %p272
      %p274 = scmp.ne.s32.totalorder %s260, %s261
      %p275 = scmp.eq.s32.totalorder %s33, 1
      %p276 = por %p274, %p275
      %p278 = scmp.ne.s32.totalorder %s261, %s277
      %p279 = scmp.eq.s32.totalorder %s33, 0
      %p280 = por %p278, %p279
      %p281 = scmp.le.s32.totalorder 1, %s27
      %p282 = scmp.lt.s32.totalorder %s27, 3
      %p283 = pnand %p281, %p282
      %p284 = pneg %p283
      // Predicated region
      $region9: #{tpu_custom_call.1} parent=5 // pred_check
        _
      $region10: #{tpu_custom_call.1} parent=5 // pred_check_branch
        %286 = sbr.rel (%p283) target = $region12
      $region11: #{tpu_custom_call.1} parent=5 // pred_region
        %s287 = ssub.s32 %s27, 1
        // Predicated region
        $region13: #{tpu_custom_call.1} parent=11 // pred_check
          %p288 = pneg %p100
        $region14: #{tpu_custom_call.1} parent=11 // pred_check_branch
          %290 = sbr.rel (%p288) target = $region16
        $region15: #{tpu_custom_call.1} parent=11 // pred_region
          %s292 = ssub.s32 1024, 1024
          %293 = vsyncadd [#allocation6], %s292
          %s294 = sshll.u32 [#allocation7], 4
          %s295 = int_to_ptr.vmem [resolvable:$true] %s294
          %300 = dma.hbm_to_vmem [thread:$0]  %s2, 1024, %s295, [#allocation6], 128, 128, 8
        $region16: #{tpu_custom_call.1} parent=11 // pred_fallthru
          _
        // Predicated region
        $region17: #{tpu_custom_call.1} parent=11 // pred_check
          %p301 = pneg %p121
        $region18: #{tpu_custom_call.1} parent=11 // pred_check_branch
          %303 = sbr.rel (%p301) target = $region20
        $region19: #{tpu_custom_call.1} parent=11 // pred_region
          _
        $region20: #{tpu_custom_call.1} parent=11 // pred_fallthru
          _
        // Predicated region
        $region21: #{tpu_custom_call.1} parent=11 // pred_check
          %p304 = pneg %p142
        $region22: #{tpu_custom_call.1} parent=11 // pred_check_branch
          %306 = sbr.rel (%p304) target = $region24
        $region23: #{tpu_custom_call.1} parent=11 // pred_region
          %s308 = ssub.s32 2048, 2048
          %309 = vsyncadd [#allocation9], %s308
          %s310 = sshll.u32 [#allocation8], 4
          %s311 = int_to_ptr.vmem [resolvable:$true] %s310
          %316 = dma.hbm_to_vmem [thread:$0]  %s4, 2048, %s311, [#allocation9], 128, 128, 8
        $region24: #{tpu_custom_call.1} parent=11 // pred_fallthru
          _
        // Predicated region
        $region25: #{tpu_custom_call.1} parent=11 // pred_check
          %p317 = pneg %p163
        $region26: #{tpu_custom_call.1} parent=11 // pred_check_branch
          %319 = sbr.rel (%p317) target = $region28
        $region27: #{tpu_custom_call.1} parent=11 // pred_region
          _
        $region28: #{tpu_custom_call.1} parent=11 // pred_fallthru
          _
        // Predicated region
        $region29: #{tpu_custom_call.1} parent=11 // pred_check
          %p320 = pneg %p184
        $region30: #{tpu_custom_call.1} parent=11 // pred_check_branch
          %322 = sbr.rel (%p320) target = $region32
        $region31: #{tpu_custom_call.1} parent=11 // pred_region
          %s324 = ssub.s32 2048, 2048
          %325 = vsyncadd [#allocation9], %s324
          %s326 = sshll.u32 [#allocation10], 4
          %s327 = int_to_ptr.vmem [resolvable:$true] %s326
          %332 = dma.hbm_to_vmem [thread:$0]  %s6, 2048, %s327, [#allocation9], 128, 128, 8
        $region32: #{tpu_custom_call.1} parent=11 // pred_fallthru
          _
        // Predicated region
        $region33: #{tpu_custom_call.1} parent=11 // pred_check
          %p333 = pneg %p205
        $region34: #{tpu_custom_call.1} parent=11 // pred_check_branch
          %335 = sbr.rel (%p333) target = $region36
        $region35: #{tpu_custom_call.1} parent=11 // pred_region
          _
        $region36: #{tpu_custom_call.1} parent=11 // pred_fallthru
          _
        // Predicated region
        $region37: #{tpu_custom_call.1} parent=11 // pred_check
          %p336 = pneg %p226
        $region38: #{tpu_custom_call.1} parent=11 // pred_check_branch
          %338 = sbr.rel (%p336) target = $region40
        $region39: #{tpu_custom_call.1} parent=11 // pred_region
          %s340 = ssub.s32 2048, 2048
          %341 = vsyncadd [#allocation12], %s340
          %s342 = sshll.u32 [#allocation11], 4
          %s343 = int_to_ptr.vmem [resolvable:$true] %s342
          %348 = dma.hbm_to_vmem [thread:$0]  %s8, 2048, %s343, [#allocation12], 128, 128, 8
        $region40: #{tpu_custom_call.1} parent=11 // pred_fallthru
          _
        // Predicated region
        $region41: #{tpu_custom_call.1} parent=11 // pred_check
          %p349 = pneg %p247
        $region42: #{tpu_custom_call.1} parent=11 // pred_check_branch
          %351 = sbr.rel (%p349) target = $region44
        $region43: #{tpu_custom_call.1} parent=11 // pred_region
          _
        $region44: #{tpu_custom_call.1} parent=11 // pred_fallthru
          _
      $region12: #{tpu_custom_call.1} parent=5 // pred_fallthru
        _
      %p352 = scmp.lt.s32.totalorder %s27, 2
      // Predicated region
      $region45: #{tpu_custom_call.1} parent=5 // pred_check
        %p353 = pneg %p352
      $region46: #{tpu_custom_call.1} parent=5 // pred_check_branch
        %355 = sbr.rel (%p353) target = $region48
      $region47: #{tpu_custom_call.1} parent=5 // pred_region
        // Predicated region
        $region49: #{tpu_custom_call.1} parent=47 // pred_check
          %p356 = pneg %p47
        $region50: #{tpu_custom_call.1} parent=47 // pred_check_branch
          %358 = sbr.rel (%p356) target = $region52
        $region51: #{tpu_custom_call.1} parent=47 // pred_region
          %s359 = sand.u32 %s37, 1
          %s360 = scalar_lea.sflag [#allocation3], %s359
          %s361 = sand.u32 %s37, 1
          %s362 = smul.addr %s361, 16
          %s363 = scalar_lea.vmem [#allocation2], %s362
          %s364 = smul.u32 2, %s27
          %s366 = ssub.s32 256, 256
          %367 = vsyncadd %s360, %s366
          %s368 = smul.addr %s364, 128
          %s369 = scalar_lea.hbm %s0, %s368
          %s370 = sshll.u32 %s363, 4
          %s371 = int_to_ptr.vmem [resolvable:$true] %s370
          %376 = dma.hbm_to_vmem [thread:$0]  %s369, 256, %s371, %s360, 128, 128, 8
        $region52: #{tpu_custom_call.1} parent=47 // pred_fallthru
          _
        // Predicated region
        $region53: #{tpu_custom_call.1} parent=47 // pred_check
          %p377 = pneg %p73
        $region54: #{tpu_custom_call.1} parent=47 // pred_check_branch
          %379 = sbr.rel (%p377) target = $region56
        $region55: #{tpu_custom_call.1} parent=47 // pred_region
          %s380 = sand.u32 %s27, 1
          %s381 = scalar_lea.sflag [#allocation6], %s380
          %s382 = sand.u32 %s63, 1
          %s383 = smul.addr %s382, 16
          %s384 = scalar_lea.vmem [#allocation5], %s383
          %s385 = smul.u32 2, %s27
          %s387 = ssub.s32 256, 256
          %388 = vsyncadd %s381, %s387
          %s389 = smul.addr %s385, 128
          %s390 = scalar_lea.hbm %s1, %s389
          %s391 = sshll.u32 %s384, 4
          %s392 = int_to_ptr.vmem [resolvable:$true] %s391
          %397 = dma.hbm_to_vmem [thread:$0]  %s390, 256, %s392, %s381, 128, 128, 8
        $region56: #{tpu_custom_call.1} parent=47 // pred_fallthru
          _
      $region48: #{tpu_custom_call.1} parent=5 // pred_fallthru
        _
      %p398 = scmp.le.s32.totalorder 1, %s27
      %p399 = scmp.lt.s32.totalorder %s27, 3
      %p400 = pnand %p398, %p399
      %p401 = pneg %p400
      // Predicated region
      $region57: #{tpu_custom_call.1} parent=5 // pred_check
        _
      $region58: #{tpu_custom_call.1} parent=5 // pred_check_branch
        %403 = sbr.rel (%p400) target = $region60
      $region59: #{tpu_custom_call.1} parent=5 // pred_region
        %s404 = ssub.s32 %s27, 1
        %s405 = sand.u32 %s40, 1
        %s406 = scalar_lea.sflag [#allocation3], %s405
        %s407 = sand.u32 %s40, 1
        %s408 = smul.addr %s407, 16
        %s409 = scalar_lea.vmem [#allocation2], %s408
        // Predicated region
        $region61: #{tpu_custom_call.1} parent=59 // pred_check
          %p410 = pneg %p53
        $region62: #{tpu_custom_call.1} parent=59 // pred_check_branch
          %412 = sbr.rel (%p410) target = $region64
        $region63: #{tpu_custom_call.1} parent=59 // pred_region
          %413 = dma.done %s406, 256
        $region64: #{tpu_custom_call.1} parent=59 // pred_fallthru
          _
        %s414 = sand.u32 %s32, 1
        %s415 = scalar_lea.sflag [#allocation6], %s414
        %s416 = sand.u32 %s66, 1
        %s417 = smul.addr %s416, 16
        %s418 = scalar_lea.vmem [#allocation5], %s417
        // Predicated region
        $region65: #{tpu_custom_call.1} parent=59 // pred_check
          %p419 = pneg %p79
        $region66: #{tpu_custom_call.1} parent=59 // pred_check_branch
          %421 = sbr.rel (%p419) target = $region68
        $region67: #{tpu_custom_call.1} parent=59 // pred_region
          %422 = dma.done %s415, 256
        $region68: #{tpu_custom_call.1} parent=59 // pred_fallthru
          _
        // Predicated region
        $region69: #{tpu_custom_call.1} parent=59 // pred_check
          %p423 = pneg %p100
        $region70: #{tpu_custom_call.1} parent=59 // pred_check_branch
          %425 = sbr.rel (%p423) target = $region72
        $region71: #{tpu_custom_call.1} parent=59 // pred_region
          %426 = dma.done [#allocation6], 1024
        $region72: #{tpu_custom_call.1} parent=59 // pred_fallthru
          _
        // Predicated region
        $region73: #{tpu_custom_call.1} parent=59 // pred_check
          %p427 = pneg %p142
        $region74: #{tpu_custom_call.1} parent=59 // pred_check_branch
          %429 = sbr.rel (%p427) target = $region76
        $region75: #{tpu_custom_call.1} parent=59 // pred_region
          %430 = dma.done [#allocation9], 2048
        $region76: #{tpu_custom_call.1} parent=59 // pred_fallthru
          _
        // Predicated region
        $region77: #{tpu_custom_call.1} parent=59 // pred_check
          %p431 = pneg %p184
        $region78: #{tpu_custom_call.1} parent=59 // pred_check_branch
          %433 = sbr.rel (%p431) target = $region80
        $region79: #{tpu_custom_call.1} parent=59 // pred_region
          %434 = dma.done [#allocation9], 2048
        $region80: #{tpu_custom_call.1} parent=59 // pred_fallthru
          _
        // Predicated region
        $region81: #{tpu_custom_call.1} parent=59 // pred_check
          %p435 = pneg %p226
        $region82: #{tpu_custom_call.1} parent=59 // pred_check_branch
          %437 = sbr.rel (%p435) target = $region84
        $region83: #{tpu_custom_call.1} parent=59 // pred_region
          %438 = dma.done [#allocation12], 2048
        $region84: #{tpu_custom_call.1} parent=59 // pred_fallthru
          _
        %s439 = sand.u32 %s40, 1
        %s440 = scalar_lea.sflag [#allocation3], %s439
        %s441 = sand.u32 %s40, 1
        %s442 = smul.addr %s441, 16
        %s443 = scalar_lea.vmem [#allocation2], %s442
        %p444 = pneg %p53
        %p445 = pneg %p50
        %s446 = sand.u32 %s32, 1
        %s447 = scalar_lea.sflag [#allocation6], %s446
        %s448 = sand.u32 %s66, 1
        %s449 = smul.addr %s448, 16
        %s450 = scalar_lea.vmem [#allocation5], %s449
        %p451 = pneg %p79
        %p452 = pneg %p76
        %p453 = pneg %p100
        %p454 = pneg %p97
        %p455 = pneg %p121
        %p456 = pneg %p118
        %p457 = pneg %p142
        %p458 = pneg %p139
        %p459 = pneg %p163
        %p460 = pneg %p160
        %p461 = pneg %p184
        %p462 = pneg %p181
        %p463 = pneg %p205
        %p464 = pneg %p202
        %p465 = pneg %p226
        %p466 = pneg %p223
        %p467 = pneg %p247
        %p468 = pneg %p244
        %p469 = pneg %p273
        %p470 = pneg %p270
        %s471 = sand.u32 %s260, 1
        %s472 = scalar_lea.sflag [#allocation4], %s471
        %s473 = sand.u32 %s260, 1
        %s474 = smul.addr %s473, 16
        %s475 = scalar_lea.vmem [#allocation13], %s474
        %s476 = smul.u32 2, %s32
        %s477 = smul.u32 2, %s32
        %s478 = smul.u32 2, %s32
        %v479 = vld [vmem:[%s409] sm:$0xff]
        %v480 = vld [vmem:[%s409 + $0x8] sm:$0xff]
        %v481 = vld [vmem:[#allocation7] sm:$0xff]
        %v482 = vld [vmem:[#allocation7 + $0x8] sm:$0xff]
        %v483 = vld [vmem:[#allocation7 + $0x10] sm:$0xff]
        %v484 = vld [vmem:[#allocation7 + $0x18] sm:$0xff]
        %v485 = vld [vmem:[#allocation7 + $0x20] sm:$0xff]
        %v486 = vld [vmem:[#allocation7 + $0x28] sm:$0xff]
        %v487 = vld [vmem:[#allocation7 + $0x30] sm:$0xff]
        %v488 = vld [vmem:[#allocation7 + $0x38] sm:$0xff]
        %v489 = vld [vmem:[%s3] sm:$0x1]
        %v491 = vlaneseq
        %v492 = vshrl.u32 %v491, 7
        %v493 = vsub.s32 0, %v492
        %v494 = vrot.slane %v489, %v493
        %vm496 = vcmask 523264
        %v498 = vsel %vm496, %v479, 0
        %v501 = vsel %vm496, %v480, 0
        %503 = vmatprep.subr.mxu0 0.0
        %504 = vmatpush1.msra.mxu0 0.0
        %505 = vmatprep.subr.mxu0 0.0
        %506 = vmatpush1.msra.mxu0 0.0
        %507 = vmatprep.subr.mxu0 0.0
        %508 = vmatpush1.msra.mxu0 0.0
        %509 = vmatprep.subr.mxu0 0.0
        %510 = vmatpush1.msra.mxu0 0.0
        %511 = vmatprep.subr.mxu0 0.0
        %512 = vmatpush1.msra.mxu0 0.0
        %513 = vmatprep.subr.mxu0 0.0
        %514 = vmatpush1.msra.mxu0 0.0
        %515 = vmatprep.subr.mxu0 0.0
        %516 = vmatpush1.msra.mxu0 0.0
        %517 = vmatprep.subr.mxu0 0.0
        %518 = vmatpush1.msra.mxu0 0.0
        %519 = vmatprep.subr.mxu0 0.0
        %520 = vmatpush1.msra.mxu0 %v488
        %521 = vmatprep.subr.mxu0 0.0
        %522 = vmatpush1.msra.mxu0 %v487
        %523 = vmatprep.subr.mxu0 0.0
        %524 = vmatpush1.msra.mxu0 %v486
        %525 = vmatprep.subr.mxu0 0.0
        %526 = vmatpush1.msra.mxu0 %v485
        %527 = vmatprep.subr.mxu0 0.0
        %528 = vmatpush1.msra.mxu0 %v484
        %529 = vmatprep.subr.mxu0 0.0
        %530 = vmatpush1.msra.mxu0 %v483
        %531 = vmatprep.subr.mxu0 0.0
        %532 = vmatpush1.msra.mxu0 %v482
        %533 = vmatprep.subr.mxu0 0.0
        %534 = vmatpush1.msra.mxu0 %v481
        %535 = vmatprep.subr.mxu0 0.0
        %536 = vmatpush2.msra.mxu0 0.0
        %537 = vmatprep.subr.mxu0 0.0
        %538 = vmatpush2.msra.mxu0 0.0
        %539 = vmatprep.subr.mxu0 0.0
        %540 = vmatpush2.msra.mxu0 0.0
        %541 = vmatprep.subr.mxu0 0.0
        %542 = vmatpush2.msra.mxu0 0.0
        %543 = vmatprep.subr.mxu0 0.0
        %544 = vmatpush2.msra.mxu0 0.0
        %545 = vmatprep.subr.mxu0 0.0
        %546 = vmatpush2.msra.mxu0 0.0
        %547 = vmatprep.subr.mxu0 0.0
        %548 = vmatpush2.msra.mxu0 0.0
        %549 = vmatprep.subr.mxu0 0.0
        %550 = vmatpush2.msra.mxu0 0.0
        %551 = vmatprep.subr.mxu0 0.0
        %552 = vmatpush2.msra.mxu0 0.0
        %553 = vmatprep.subr.mxu0 0.0
        %554 = vmatpush2.msra.mxu0 0.0
        %555 = vmatprep.subr.mxu0 0.0
        %556 = vmatpush2.msra.mxu0 0.0
        %557 = vmatprep.subr.mxu0 0.0
        %558 = vmatpush2.msra.mxu0 0.0
        %559 = vmatprep.subr.mxu0 0.0
        %560 = vmatpush2.msra.mxu0 0.0
        %561 = vmatprep.subr.mxu0 0.0
        %562 = vmatpush2.msra.mxu0 0.0
        %563 = vmatprep.subr.mxu0 0.0
        %564 = vmatpush2.msra.mxu0 0.0
        %565 = vmatprep.subr.mxu0 0.0
        %566 = vmatpush2.msra.mxu0 0.0
        %567 = vmatprep.mubr.f32.mxu0 0.0
        %568 = vmatmul.mubr.f32.gmra.mxu0 %v498
        %v569 = vpop.f32.mrf.mxu0
        %v570 = vadd.f32 %v494, %v569
        %v571 = vpop.f32.mrf.mxu0
        %572 = vmatprep.mubr.f32.mxu0 0.0
        %573 = vmatmul.mubr.f32.gmra.mxu0 %v501
        %v574 = vpop.f32.mrf.mxu0
        %v575 = vadd.f32 %v494, %v574
        %v576 = vpop.f32.mrf.mxu0
        %577 = vdwg.mxu0
        %v578 = vmax.f32 %v570, 0.0
        %v579 = vmax.f32 %v575, 0.0
        %v580 = vld [vmem:[#allocation8] sm:$0xff]
        %v581 = vld [vmem:[#allocation8 + $0x8] sm:$0xff]
        %v582 = vld [vmem:[#allocation8 + $0x10] sm:$0xff]
        %v583 = vld [vmem:[#allocation8 + $0x18] sm:$0xff]
        %v584 = vld [vmem:[#allocation8 + $0x20] sm:$0xff]
        %v585 = vld [vmem:[#allocation8 + $0x28] sm:$0xff]
        %v586 = vld [vmem:[#allocation8 + $0x30] sm:$0xff]
        %v587 = vld [vmem:[#allocation8 + $0x38] sm:$0xff]
        %v588 = vld [vmem:[#allocation8 + $0x40] sm:$0xff]
        %v589 = vld [vmem:[#allocation8 + $0x48] sm:$0xff]
        %v590 = vld [vmem:[#allocation8 + $0x50] sm:$0xff]
        %v591 = vld [vmem:[#allocation8 + $0x58] sm:$0xff]
        %v592 = vld [vmem:[#allocation8 + $0x60] sm:$0xff]
        %v593 = vld [vmem:[#allocation8 + $0x68] sm:$0xff]
        %v594 = vld [vmem:[#allocation8 + $0x70] sm:$0xff]
        %v595 = vld [vmem:[#allocation8 + $0x78] sm:$0xff]
        %v596 = vld [vmem:[%s5] sm:$0x1]
        %v598 = vlaneseq
        %v599 = vshrl.u32 %v598, 7
        %v600 = vsub.s32 0, %v599
        %v601 = vrot.slane %v596, %v600
        %603 = vmatprep.subr.mxu0 0.0
        %604 = vmatpush1.msra.mxu0 %v595
        %605 = vmatprep.subr.mxu0 0.0
        %606 = vmatpush1.msra.mxu0 %v594
        %607 = vmatprep.subr.mxu0 0.0
        %608 = vmatpush1.msra.mxu0 %v593
        %609 = vmatprep.subr.mxu0 0.0
        %610 = vmatpush1.msra.mxu0 %v592
        %611 = vmatprep.subr.mxu0 0.0
        %612 = vmatpush1.msra.mxu0 %v591
        %613 = vmatprep.subr.mxu0 0.0
        %614 = vmatpush1.msra.mxu0 %v590
        %615 = vmatprep.subr.mxu0 0.0
        %616 = vmatpush1.msra.mxu0 %v589
        %617 = vmatprep.subr.mxu0 0.0
        %618 = vmatpush1.msra.mxu0 %v588
        %619 = vmatprep.subr.mxu0 0.0
        %620 = vmatpush1.msra.mxu0 %v587
        %621 = vmatprep.subr.mxu0 0.0
        %622 = vmatpush1.msra.mxu0 %v586
        %623 = vmatprep.subr.mxu0 0.0
        %624 = vmatpush1.msra.mxu0 %v585
        %625 = vmatprep.subr.mxu0 0.0
        %626 = vmatpush1.msra.mxu0 %v584
        %627 = vmatprep.subr.mxu0 0.0
        %628 = vmatpush1.msra.mxu0 %v583
        %629 = vmatprep.subr.mxu0 0.0
        %630 = vmatpush1.msra.mxu0 %v582
        %631 = vmatprep.subr.mxu0 0.0
        %632 = vmatpush1.msra.mxu0 %v581
        %633 = vmatprep.subr.mxu0 0.0
        %634 = vmatpush1.msra.mxu0 %v580
        %635 = vmatprep.subr.mxu0 0.0
        %636 = vmatpush2.msra.mxu0 0.0
        %637 = vmatprep.subr.mxu0 0.0
        %638 = vmatpush2.msra.mxu0 0.0
        %639 = vmatprep.subr.mxu0 0.0
        %640 = vmatpush2.msra.mxu0 0.0
        %641 = vmatprep.subr.mxu0 0.0
        %642 = vmatpush2.msra.mxu0 0.0
        %643 = vmatprep.subr.mxu0 0.0
        %644 = vmatpush2.msra.mxu0 0.0
        %645 = vmatprep.subr.mxu0 0.0
        %646 = vmatpush2.msra.mxu0 0.0
        %647 = vmatprep.subr.mxu0 0.0
        %648 = vmatpush2.msra.mxu0 0.0
        %649 = vmatprep.subr.mxu0 0.0
        %650 = vmatpush2.msra.mxu0 0.0
        %651 = vmatprep.subr.mxu0 0.0
        %652 = vmatpush2.msra.mxu0 0.0
        %653 = vmatprep.subr.mxu0 0.0
        %654 = vmatpush2.msra.mxu0 0.0
        %655 = vmatprep.subr.mxu0 0.0
        %656 = vmatpush2.msra.mxu0 0.0
        %657 = vmatprep.subr.mxu0 0.0
        %658 = vmatpush2.msra.mxu0 0.0
        %659 = vmatprep.subr.mxu0 0.0
        %660 = vmatpush2.msra.mxu0 0.0
        %661 = vmatprep.subr.mxu0 0.0
        %662 = vmatpush2.msra.mxu0 0.0
        %663 = vmatprep.subr.mxu0 0.0
        %664 = vmatpush2.msra.mxu0 0.0
        %665 = vmatprep.subr.mxu0 0.0
        %666 = vmatpush2.msra.mxu0 0.0
        %667 = vmatprep.mubr.f32.mxu0 0.0
        %668 = vmatmul.mubr.f32.gmra.mxu0 %v578
        %v669 = vpop.f32.mrf.mxu0
        %v670 = vadd.f32 %v601, %v669
        %v671 = vpop.f32.mrf.mxu0
        %672 = vmatprep.mubr.f32.mxu0 0.0
        %673 = vmatmul.mubr.f32.gmra.mxu0 %v579
        %v674 = vpop.f32.mrf.mxu0
        %v675 = vadd.f32 %v601, %v674
        %v676 = vpop.f32.mrf.mxu0
        %677 = vdwg.mxu0
        %v678 = vld [vmem:[%s418] sm:$0xff]
        %v679 = vld [vmem:[%s418 + $0x8] sm:$0xff]
        %v680 = vmul.f32 %v670, %v678
        %v681 = vmul.f32 %v675, %v679
        %v682 = vld [vmem:[#allocation10] sm:$0xff]
        %v683 = vld [vmem:[#allocation10 + $0x8] sm:$0xff]
        %v684 = vld [vmem:[#allocation10 + $0x10] sm:$0xff]
        %v685 = vld [vmem:[#allocation10 + $0x18] sm:$0xff]
        %v686 = vld [vmem:[#allocation10 + $0x20] sm:$0xff]
        %v687 = vld [vmem:[#allocation10 + $0x28] sm:$0xff]
        %v688 = vld [vmem:[#allocation10 + $0x30] sm:$0xff]
        %v689 = vld [vmem:[#allocation10 + $0x38] sm:$0xff]
        %v690 = vld [vmem:[#allocation10 + $0x40] sm:$0xff]
        %v691 = vld [vmem:[#allocation10 + $0x48] sm:$0xff]
        %v692 = vld [vmem:[#allocation10 + $0x50] sm:$0xff]
        %v693 = vld [vmem:[#allocation10 + $0x58] sm:$0xff]
        %v694 = vld [vmem:[#allocation10 + $0x60] sm:$0xff]
        %v695 = vld [vmem:[#allocation10 + $0x68] sm:$0xff]
        %v696 = vld [vmem:[#allocation10 + $0x70] sm:$0xff]
        %v697 = vld [vmem:[#allocation10 + $0x78] sm:$0xff]
        %v698 = vld [vmem:[%s7] sm:$0x1]
        %v700 = vlaneseq
        %v701 = vshrl.u32 %v700, 7
        %v702 = vsub.s32 0, %v701
        %v703 = vrot.slane %v698, %v702
        %705 = vmatprep.subr.mxu0 0.0
        %706 = vmatpush1.msra.mxu0 %v697
        %707 = vmatprep.subr.mxu0 0.0
        %708 = vmatpush1.msra.mxu0 %v696
        %709 = vmatprep.subr.mxu0 0.0
        %710 = vmatpush1.msra.mxu0 %v695
        %711 = vmatprep.subr.mxu0 0.0
        %712 = vmatpush1.msra.mxu0 %v694
        %713 = vmatprep.subr.mxu0 0.0
        %714 = vmatpush1.msra.mxu0 %v693
        %715 = vmatprep.subr.mxu0 0.0
        %716 = vmatpush1.msra.mxu0 %v692
        %717 = vmatprep.subr.mxu0 0.0
        %718 = vmatpush1.msra.mxu0 %v691
        %719 = vmatprep.subr.mxu0 0.0
        %720 = vmatpush1.msra.mxu0 %v690
        %721 = vmatprep.subr.mxu0 0.0
        %722 = vmatpush1.msra.mxu0 %v689
        %723 = vmatprep.subr.mxu0 0.0
        %724 = vmatpush1.msra.mxu0 %v688
        %725 = vmatprep.subr.mxu0 0.0
        %726 = vmatpush1.msra.mxu0 %v687
        %727 = vmatprep.subr.mxu0 0.0
        %728 = vmatpush1.msra.mxu0 %v686
        %729 = vmatprep.subr.mxu0 0.0
        %730 = vmatpush1.msra.mxu0 %v685
        %731 = vmatprep.subr.mxu0 0.0
        %732 = vmatpush1.msra.mxu0 %v684
        %733 = vmatprep.subr.mxu0 0.0
        %734 = vmatpush1.msra.mxu0 %v683
        %735 = vmatprep.subr.mxu0 0.0
        %736 = vmatpush1.msra.mxu0 %v682
        %737 = vmatprep.subr.mxu0 0.0
        %738 = vmatpush2.msra.mxu0 0.0
        %739 = vmatprep.subr.mxu0 0.0
        %740 = vmatpush2.msra.mxu0 0.0
        %741 = vmatprep.subr.mxu0 0.0
        %742 = vmatpush2.msra.mxu0 0.0
        %743 = vmatprep.subr.mxu0 0.0
        %744 = vmatpush2.msra.mxu0 0.0
        %745 = vmatprep.subr.mxu0 0.0
        %746 = vmatpush2.msra.mxu0 0.0
        %747 = vmatprep.subr.mxu0 0.0
        %748 = vmatpush2.msra.mxu0 0.0
        %749 = vmatprep.subr.mxu0 0.0
        %750 = vmatpush2.msra.mxu0 0.0
        %751 = vmatprep.subr.mxu0 0.0
        %752 = vmatpush2.msra.mxu0 0.0
        %753 = vmatprep.subr.mxu0 0.0
        %754 = vmatpush2.msra.mxu0 0.0
        %755 = vmatprep.subr.mxu0 0.0
        %756 = vmatpush2.msra.mxu0 0.0
        %757 = vmatprep.subr.mxu0 0.0
        %758 = vmatpush2.msra.mxu0 0.0
        %759 = vmatprep.subr.mxu0 0.0
        %760 = vmatpush2.msra.mxu0 0.0
        %761 = vmatprep.subr.mxu0 0.0
        %762 = vmatpush2.msra.mxu0 0.0
        %763 = vmatprep.subr.mxu0 0.0
        %764 = vmatpush2.msra.mxu0 0.0
        %765 = vmatprep.subr.mxu0 0.0
        %766 = vmatpush2.msra.mxu0 0.0
        %767 = vmatprep.subr.mxu0 0.0
        %768 = vmatpush2.msra.mxu0 0.0
        %769 = vmatprep.mubr.f32.mxu0 0.0
        %770 = vmatmul.mubr.f32.gmra.mxu0 %v680
        %v771 = vpop.f32.mrf.mxu0
        %v772 = vadd.f32 %v703, %v771
        %v773 = vpop.f32.mrf.mxu0
        %774 = vmatprep.mubr.f32.mxu0 0.0
        %775 = vmatmul.mubr.f32.gmra.mxu0 %v681
        %v776 = vpop.f32.mrf.mxu0
        %v777 = vadd.f32 %v703, %v776
        %v778 = vpop.f32.mrf.mxu0
        %779 = vdwg.mxu0
        %v780 = vtanh.pop %v772
        %v781 = vtanh.pop %v777
        %v782 = vld [vmem:[#allocation11] sm:$0xff]
        %v783 = vld [vmem:[#allocation11 + $0x8] sm:$0xff]
        %v784 = vld [vmem:[#allocation11 + $0x10] sm:$0xff]
        %v785 = vld [vmem:[#allocation11 + $0x18] sm:$0xff]
        %v786 = vld [vmem:[#allocation11 + $0x20] sm:$0xff]
        %v787 = vld [vmem:[#allocation11 + $0x28] sm:$0xff]
        %v788 = vld [vmem:[#allocation11 + $0x30] sm:$0xff]
        %v789 = vld [vmem:[#allocation11 + $0x38] sm:$0xff]
        %v790 = vld [vmem:[#allocation11 + $0x40] sm:$0xff]
        %v791 = vld [vmem:[#allocation11 + $0x48] sm:$0xff]
        %v792 = vld [vmem:[#allocation11 + $0x50] sm:$0xff]
        %v793 = vld [vmem:[#allocation11 + $0x58] sm:$0xff]
        %v794 = vld [vmem:[#allocation11 + $0x60] sm:$0xff]
        %v795 = vld [vmem:[#allocation11 + $0x68] sm:$0xff]
        %v796 = vld [vmem:[#allocation11 + $0x70] sm:$0xff]
        %v797 = vld [vmem:[#allocation11 + $0x78] sm:$0xff]
        %v798 = vld [vmem:[%s9] sm:$0x1]
        %v800 = vlaneseq
        %v801 = vshrl.u32 %v800, 7
        %v802 = vsub.s32 0, %v801
        %v803 = vrot.slane %v798, %v802
        %805 = vmatprep.subr.mxu0 0.0
        %806 = vmatpush1.msra.mxu0 %v797
        %807 = vmatprep.subr.mxu0 0.0
        %808 = vmatpush1.msra.mxu0 %v796
        %809 = vmatprep.subr.mxu0 0.0
        %810 = vmatpush1.msra.mxu0 %v795
        %811 = vmatprep.subr.mxu0 0.0
        %812 = vmatpush1.msra.mxu0 %v794
        %813 = vmatprep.subr.mxu0 0.0
        %814 = vmatpush1.msra.mxu0 %v793
        %815 = vmatprep.subr.mxu0 0.0
        %816 = vmatpush1.msra.mxu0 %v792
        %817 = vmatprep.subr.mxu0 0.0
        %818 = vmatpush1.msra.mxu0 %v791
        %819 = vmatprep.subr.mxu0 0.0
        %820 = vmatpush1.msra.mxu0 %v790
        %821 = vmatprep.subr.mxu0 0.0
        %822 = vmatpush1.msra.mxu0 %v789
        %823 = vmatprep.subr.mxu0 0.0
        %824 = vmatpush1.msra.mxu0 %v788
        %825 = vmatprep.subr.mxu0 0.0
        %826 = vmatpush1.msra.mxu0 %v787
        %827 = vmatprep.subr.mxu0 0.0
        %828 = vmatpush1.msra.mxu0 %v786
        %829 = vmatprep.subr.mxu0 0.0
        %830 = vmatpush1.msra.mxu0 %v785
        %831 = vmatprep.subr.mxu0 0.0
        %832 = vmatpush1.msra.mxu0 %v784
        %833 = vmatprep.subr.mxu0 0.0
        %834 = vmatpush1.msra.mxu0 %v783
        %835 = vmatprep.subr.mxu0 0.0
        %836 = vmatpush1.msra.mxu0 %v782
        %837 = vmatprep.subr.mxu0 0.0
        %838 = vmatpush2.msra.mxu0 0.0
        %839 = vmatprep.subr.mxu0 0.0
        %840 = vmatpush2.msra.mxu0 0.0
        %841 = vmatprep.subr.mxu0 0.0
        %842 = vmatpush2.msra.mxu0 0.0
        %843 = vmatprep.subr.mxu0 0.0
        %844 = vmatpush2.msra.mxu0 0.0
        %845 = vmatprep.subr.mxu0 0.0
        %846 = vmatpush2.msra.mxu0 0.0
        %847 = vmatprep.subr.mxu0 0.0
        %848 = vmatpush2.msra.mxu0 0.0
        %849 = vmatprep.subr.mxu0 0.0
        %850 = vmatpush2.msra.mxu0 0.0
        %851 = vmatprep.subr.mxu0 0.0
        %852 = vmatpush2.msra.mxu0 0.0
        %853 = vmatprep.subr.mxu0 0.0
        %854 = vmatpush2.msra.mxu0 0.0
        %855 = vmatprep.subr.mxu0 0.0
        %856 = vmatpush2.msra.mxu0 0.0
        %857 = vmatprep.subr.mxu0 0.0
        %858 = vmatpush2.msra.mxu0 0.0
        %859 = vmatprep.subr.mxu0 0.0
        %860 = vmatpush2.msra.mxu0 0.0
        %861 = vmatprep.subr.mxu0 0.0
        %862 = vmatpush2.msra.mxu0 0.0
        %863 = vmatprep.subr.mxu0 0.0
        %864 = vmatpush2.msra.mxu0 0.0
        %865 = vmatprep.subr.mxu0 0.0
        %866 = vmatpush2.msra.mxu0 0.0
        %867 = vmatprep.subr.mxu0 0.0
        %868 = vmatpush2.msra.mxu0 0.0
        %869 = vmatprep.mubr.f32.mxu0 0.0
        %870 = vmatmul.mubr.f32.gmra.mxu0 %v780
        %v871 = vpop.f32.mrf.mxu0
        %v872 = vadd.f32 %v803, %v871
        %v873 = vpop.f32.mrf.mxu0
        %874 = vmatprep.mubr.f32.mxu0 0.0
        %875 = vmatmul.mubr.f32.gmra.mxu0 %v781
        %v876 = vpop.f32.mrf.mxu0
        %v877 = vadd.f32 %v803, %v876
        %v878 = vpop.f32.mrf.mxu0
        %879 = vdwg.mxu0
        %v880 = vtanh.pop %v872
        %v881 = vtanh.pop %v877
        %v882 = vtanh.pop %v880
        %v883 = vtanh.pop %v881
        %884 = vst [vmem:[%s475] sm:$0xff] %v882
        %885 = vst [vmem:[%s475 + $0x8] sm:$0xff] %v883
        %s886 = sand.u32 %s260, 1
        %s887 = scalar_lea.sflag [#allocation4], %s886
        %s888 = sand.u32 %s260, 1
        %s889 = smul.addr %s888, 16
        %s890 = scalar_lea.vmem [#allocation13], %s889
        // Predicated region
        $region85: #{tpu_custom_call.1} parent=59 // pred_check
          %p891 = pneg %p270
        $region86: #{tpu_custom_call.1} parent=59 // pred_check_branch
          %893 = sbr.rel (%p891) target = $region88
        $region87: #{tpu_custom_call.1} parent=59 // pred_region
          %s894 = smul.u32 2, %s32
          %s896 = ssub.s32 256, 256
          %897 = vsyncadd %s887, %s896
          %s898 = smul.addr %s894, 128
          %s899 = scalar_lea.hbm %s10, %s898
          %s900 = sshll.u32 %s890, 4
          %s901 = int_to_ptr.vmem [resolvable:$true] %s900
          %906 = dma.vmem_to_hbm [thread:$0]  %s901, 256, %s899, %s887, 128, 128, 8
        $region88: #{tpu_custom_call.1} parent=59 // pred_fallthru
          _
      $region60: #{tpu_custom_call.1} parent=5 // pred_fallthru
        _
      %p907 = scmp.le.s32.totalorder 2, %s27
      // Predicated region
      $region89: #{tpu_custom_call.1} parent=5 // pred_check
        %p908 = pneg %p907
      $region90: #{tpu_custom_call.1} parent=5 // pred_check_branch
        %910 = sbr.rel (%p908) target = $region92
      $region91: #{tpu_custom_call.1} parent=5 // pred_region
        %s911 = ssub.s32 %s27, 2
        // Predicated region
        $region93: #{tpu_custom_call.1} parent=91 // pred_check
          %p912 = pneg %p276
        $region94: #{tpu_custom_call.1} parent=91 // pred_check_branch
          %914 = sbr.rel (%p912) target = $region96
        $region95: #{tpu_custom_call.1} parent=91 // pred_region
          %s915 = sand.u32 %s261, 1
          %s916 = scalar_lea.sflag [#allocation4], %s915
          %s917 = sand.u32 %s261, 1
          %s918 = smul.addr %s917, 16
          %s919 = scalar_lea.vmem [#allocation13], %s918
          %920 = dma.done %s916, 256
        $region96: #{tpu_custom_call.1} parent=91 // pred_fallthru
          _
      $region92: #{tpu_custom_call.1} parent=5 // pred_fallthru
        _
    $region6: #{tpu_custom_call.1} parent=1 // loop_footer
      %s31 = sadd.s32 1, %s27
    $region7: #{tpu_custom_call.1} parent=1 // loop_footer_branch
      %26 = sbr.rel target = $region3
    $region8: #{tpu_custom_call.1} parent=1 // loop_exit
      _
    %921 = vsyncpa [#allocation3], 1
    %s922 = scalar_lea.sflag [#allocation3], 1
    %923 = vsyncpa %s922, 1
    %924 = vsyncpa [#allocation6], 1
    %s925 = scalar_lea.sflag [#allocation6], 1
    %926 = vsyncpa %s925, 1
    %927 = vsyncpa [#allocation9], 1
    %928 = vsyncpa [#allocation12], 1
    %929 = vsyncpa [#allocation4], 1
    %s930 = scalar_lea.sflag [#allocation4], 1
    %931 = vsyncpa %s930, 1

</llo_original>
